<compile_context>
chip_gen: v7x
topology: tpu7x:2x2x1
jax: 0.10.0
libtpu: 0.0.40
codegen_flags: <defaults>
</compile_context>

<pallas_src>
import jax
import jax.numpy as jnp
from jax.experimental import pallas as pl
from jax.experimental.pallas import tpu as pltpu


def _target_tile_bytes() -> int:
    """Per-generation tile-size target (bytes per input buffer)."""
    try:
        kind = jax.devices()[0].device_kind.lower()
    except Exception:
        return 2 * 1024 * 1024
    if "v6" in kind or "v7" in kind or "7x" in kind:
        # v6e/v7x: 4 MiB tiles; 4 MiB x 2 buffers x (in+out) = 16 MiB fits the
        # 32 MiB scoped-VMEM default on both.
        return 4 * 1024 * 1024
    # v5e (16 MiB scoped-VMEM default) and unknown/older chips: 2 MiB tiles.
    return 2 * 1024 * 1024


def _scale_kernel(scalar_ref, x_ref, o_ref):
    # scalar_ref: (1,) f32 in SMEM; x_ref / o_ref: (tile_rows, lane) in VMEM.
    s = scalar_ref[0]
    # Native-dtype multiply (bf16 stays bf16 on v6e/v7x; compiler handles v5e).
    o_ref[...] = x_ref[...] * s.astype(x_ref.dtype)


def scale_transform(x: jax.Array, key: jax.Array, sigma: float = 0.1) -> jax.Array:
    """Apply ScaleTransform: multiply x by a single N(0, sigma) scalar."""
    # Sample the random scalar (equivalent to torch.normal(0, sigma, size=(1,))).
    scalar = (sigma * jax.random.normal(key, (1,))).astype(jnp.float32)

    orig_shape = x.shape
    orig_dtype = x.dtype
    total = x.size
    itemsize = jnp.dtype(orig_dtype).itemsize

    # ---- lane width: largest of {512, 256, 128} dividing the element count so
    # the reshape is free and no padding is needed (the common case).
    lane = next((l for l in (512, 256, 128) if total % l == 0), None)
    if lane is None:
        lane = 512  # ragged tail: pad < lane elements (rare for real activations)

    rows = pl.cdiv(total, lane)
    pad = rows * lane - total

    flat = x.reshape(-1)
    if pad:
        flat = jnp.pad(flat, (0, pad))
    x2d = flat.reshape(rows, lane)

    # ---- tile size in bytes (constant bytes/step across dtypes), rows multiple of 8.
    target_bytes = _target_tile_bytes()
    tile_rows = max(8, (target_bytes // (lane * itemsize)) // 8 * 8)

    if rows >= 16:
        # Ensure the "parallel" grid has >= 2 steps (v7x megacore split); Pallas
        # masks the partial last block, so tile_rows need not divide rows.
        cap = ((pl.cdiv(rows, 2) + 7) // 8) * 8
        tile_rows = max(8, min(tile_rows, cap))
    else:
        # Small input: a single full-extent block (legal even if rows % 8 != 0).
        tile_rows = rows

    grid = (pl.cdiv(rows, tile_rows),)

    out2d = pl.pallas_call(
        _scale_kernel,
        out_shape=jax.ShapeDtypeStruct((rows, lane), orig_dtype),
        grid=grid,
        in_specs=[
            pl.BlockSpec(memory_space=pltpu.SMEM),             # random scalar
            pl.BlockSpec((tile_rows, lane), lambda i: (i, 0)),  # x row-tile
        ],
        out_specs=pl.BlockSpec((tile_rows, lane), lambda i: (i, 0)),
        compiler_params=pltpu.CompilerParams(
            dimension_semantics=("parallel",),
        ),
    )(scalar, x2d)

    out_flat = out2d.reshape(-1)
    if pad:
        out_flat = out_flat[:total]
    return out_flat.reshape(orig_shape)


if __name__ == "__main__":
    key = jax.random.PRNGKey(0)
    k_x, k_scalar = jax.random.split(key)
    sigma = 0.1

    def ref_scale(xv, k):
        s = (sigma * jax.random.normal(k, (1,))).astype(jnp.float32)
        return (xv * s[0].astype(xv.dtype)).astype(xv.dtype)

    # 1) Small NCHW input consistent with the module's usage (single-block path).
    x1 = jax.random.normal(k_x, (2, 4, 16, 16), dtype=jnp.float32)
    o1 = jax.block_until_ready(scale_transform(x1, k_scalar, sigma=sigma))
    assert o1.shape == x1.shape and o1.dtype == x1.dtype
    assert jnp.allclose(o1, ref_scale(x1, k_scalar), atol=1e-6, rtol=1e-6)

    # 2) Multi-step grid with a partial (masked) last row-block, no wrapper pad.
    x2 = jax.random.normal(k_x, (2, 4, 75, 128), dtype=jnp.float32)
    o2 = jax.block_until_ready(scale_transform(x2, k_scalar, sigma=sigma))
    assert jnp.allclose(o2, ref_scale(x2, k_scalar), atol=1e-6, rtol=1e-6)

    # 3) bf16 native-dtype multiply path.
    x3 = jax.random.normal(k_x, (2, 4, 16, 16)).astype(jnp.bfloat16)
    o3 = jax.block_until_ready(scale_transform(x3, k_scalar, sigma=sigma))
    assert o3.dtype == jnp.bfloat16
    assert jnp.allclose(o3.astype(jnp.float32),
                        ref_scale(x3, k_scalar).astype(jnp.float32),
                        atol=1e-2, rtol=1e-2)

    # 4) Ragged element count (lane-tail pad fallback path).
    x4 = jax.random.normal(k_x, (3, 5, 7), dtype=jnp.float32)
    o4 = jax.block_until_ready(scale_transform(x4, k_scalar, sigma=sigma))
    assert o4.shape == x4.shape
    assert jnp.allclose(o4, ref_scale(x4, k_scalar), atol=1e-6, rtol=1e-6)

    print("KERNEL_OK")
</pallas_src>

<mosaic_0001>
module attributes {stable_mosaic.version = 11 : i64} {
  func.func @_scale_kernel(%arg0: i32, %arg1: memref<1xf32, #tpu.memory_space<smem>>, %arg2: memref<4x512xf32, #tpu.memory_space<vmem>>, %arg3: memref<4x512xf32, #tpu.memory_space<vmem>>) attributes {dimension_semantics = [#tpu.dimension_semantics<parallel>], iteration_bounds = array<i64: 1>, scalar_prefetch = 0 : i64, scratch_operands = 0 : i64, tpu.core_type = #tpu.core_type<tc>, window_params = [{transform_indices = @transform_0, window_bounds = array<i64: 1>}, {transform_indices = @transform_1, window_bounds = array<i64: 4, 512>}, {transform_indices = @transform_2, window_bounds = array<i64: 4, 512>}]} {
    %c0 = arith.constant 0 : index
    %0 = memref.load %arg1[%c0] : memref<1xf32, #tpu.memory_space<smem>>
    %c0_0 = arith.constant 0 : index
    %c0_1 = arith.constant 0 : index
    %1 = vector.load %arg2[%c0_0, %c0_1] : memref<4x512xf32, #tpu.memory_space<vmem>>, vector<4x512xf32>
    %2 = vector.broadcast %0 : f32 to vector<4x512xf32>
    %3 = arith.mulf %1, %2 : vector<4x512xf32>
    %c0_2 = arith.constant 0 : index
    %c0_3 = arith.constant 0 : index
    %4 = vector.load %arg3[%c0_2, %c0_3] : memref<4x512xf32, #tpu.memory_space<vmem>>, vector<4x512xf32>
    tpu.vector_store %arg3[%c0_2, %c0_3], %3 {strides = array<i32>} : memref<4x512xf32, #tpu.memory_space<vmem>>, vector<4x512xf32>,
    return
  }
  func.func @transform_0(%arg0: i32) -> i32 {
    %c0_i32 = arith.constant 0 : i32
    %c0_i32_0 = arith.constant 0 : i32
    return %c0_i32 : i32
  }
  func.func @transform_1(%arg0: i32) -> (i32, i32) {
    %c0_i32 = arith.constant 0 : i32
    %c0_i32_0 = arith.constant 0 : i32
    return %arg0, %c0_i32 : i32, i32
  }
  func.func @transform_2(%arg0: i32) -> (i32, i32) {
    %c0_i32 = arith.constant 0 : i32
    %c0_i32_0 = arith.constant 0 : i32
    return %arg0, %c0_i32 : i32, i32
  }
}

</mosaic_0001>

<llo_original>
// kernel: tpu_custom_call.1
$region0: #{tpu_custom_call.1}
  #allocation0 [shape = 'u32[]', space=smem, size = 0x4, offset = 0x4, fixed_abs, tag = 'smem constant byte address 0x4 - core index']
  #allocation1 [shape = 'u32[144,128]{1,0:T(1,128)}', space=vmem, size = 0x12000, scoped, tag = 'internal scratch']
  #allocation2 [shape = 'f32[1]{0:T(128)S(6)}', space=smem, size = 0x200, scoped, tag = 'scoped memory for tpu_custom_call.1']
  %s0 = inlined_call_operand.<no memory space> [shape: f32[1], index: 0, kind: input, shape index: {}]
  %s1 = inlined_call_operand.hbm [shape: f32[4,512], index: 1, kind: input, shape index: {}]
  %s2 = inlined_call_operand.hbm [shape: f32[4,512], index: 2, kind: output, shape index: {}]
  %s3 = sld [smem:[#allocation0]]
  $region22: #{tpu_custom_call.1} parent=0
    _
  %s5 = ssub.s32 1, %s3
  %s6 = scalar_select 0, %s5, %s3
  %7 = sst [smem:[#allocation2]] %s0
  $region1: #{tpu_custom_call.1} parent=0
    #allocation3 [shape = 'u8[8192]{0}', space=vmem, size = 0x2000, scoped, tag = 'input window, operand 1, single buffered']
    #allocation4 [shape = 's32[1]{0}', space=sflag, size = 0x4, scoped, tag = 'scoped memory for tpu_custom_call.1']
    #allocation5 [shape = 's32[1]{0}', space=sflag, size = 0x4, scoped, tag = 'scoped memory for tpu_custom_call.1']
    #allocation6 [shape = 'u8[8192]{0}', space=vmem, size = 0x2000, scoped, tag = 'output window, operand 0, single buffered']
    %8 = vsyncpa [#allocation4], 0
    %9 = vsyncpa [#allocation5], 0
    // Predicated region
    $region2: #{tpu_custom_call.1} parent=1 // pred_check
      _
    $region3: #{tpu_custom_call.1} parent=1 // pred_check_branch
      %11 = sbr.rel (0) target = $region5
    $region4: #{tpu_custom_call.1} parent=1 // pred_region
      _
    $region5: #{tpu_custom_call.1} parent=1 // pred_fallthru
      _
    // Predicated region
    $region6: #{tpu_custom_call.1} parent=1 // pred_check
      _
    $region7: #{tpu_custom_call.1} parent=1 // pred_check_branch
      %13 = sbr.rel (0) target = $region9
    $region8: #{tpu_custom_call.1} parent=1 // pred_region
      %s15 = ssub.s32 256, 256
      %16 = vsyncadd [#allocation4], %s15
      %s18 = sshll.u32 [#allocation3], 4
      %s19 = int_to_ptr.vmem [resolvable:$true] %s18
      %21 = dma.hbm_to_vmem [thread:$0]  %s1, 256, %s19, [#allocation4]
    $region9: #{tpu_custom_call.1} parent=1 // pred_fallthru
      _
    // Predicated region
    $region10: #{tpu_custom_call.1} parent=1 // pred_check
      _
    $region11: #{tpu_custom_call.1} parent=1 // pred_check_branch
      %23 = sbr.rel (0) target = $region13
    $region12: #{tpu_custom_call.1} parent=1 // pred_region
      %24 = dma.done [#allocation4], 256
    $region13: #{tpu_custom_call.1} parent=1 // pred_fallthru
      _
    %s25 = sld [smem:[#allocation2]]
    %v26 = vld [vmem:[#allocation3] sm:$0xff]
    %v27 = vld [vmem:[#allocation3 + $0x8] sm:$0xff]
    %v28 = vstv %s25
    %v29 = vmul.f32 %v26, %v28
    %v30 = vmul.f32 %v27, %v28
    %31 = vst [vmem:[#allocation6] sm:$0xff] %v29
    %32 = vst [vmem:[#allocation6 + $0x8] sm:$0xff] %v30
    // Predicated region
    $region14: #{tpu_custom_call.1} parent=1 // pred_check
      _
    $region15: #{tpu_custom_call.1} parent=1 // pred_check_branch
      %34 = sbr.rel (0) target = $region17
    $region16: #{tpu_custom_call.1} parent=1 // pred_region
      %s36 = ssub.s32 256, 256
      %37 = vsyncadd [#allocation5], %s36
      %s39 = sshll.u32 [#allocation6], 4
      %s40 = int_to_ptr.vmem [resolvable:$true] %s39
      %42 = dma.vmem_to_hbm [thread:$0]  %s40, 256, %s2, [#allocation5]
    $region17: #{tpu_custom_call.1} parent=1 // pred_fallthru
      _
    // Predicated region
    $region18: #{tpu_custom_call.1} parent=1 // pred_check
      _
    $region19: #{tpu_custom_call.1} parent=1 // pred_check_branch
      %44 = sbr.rel (0) target = $region21
    $region20: #{tpu_custom_call.1} parent=1 // pred_region
      %45 = dma.done [#allocation5], 256
    $region21: #{tpu_custom_call.1} parent=1 // pred_fallthru
      _
    %46 = vsyncpa [#allocation4], 1
    %47 = vsyncpa [#allocation5], 1

</llo_original>
